<compile_context>
chip_gen: v6e
topology: v6e:2x2x1
jax: 0.10.0
libtpu: 0.0.40
codegen_flags: <defaults>
</compile_context>

<pallas_src>
import jax
import jax.numpy as jnp
from jax.experimental import pallas as pl
from jax.experimental.pallas import tpu as pltpu


def _gather_kernel(idx_ref, emb_t_ref, out_t_ref):
    # idx_ref:   (1, TN)  int32 token ids for this block
    # emb_t_ref: (D, V)   float32 transposed embedding table (resident)
    # out_t_ref: (D, TN)  float32 gathered rows, transposed (lane-dense on TN)
    idx = idx_ref[...]                                        # (1, TN)
    v = emb_t_ref.shape[1]
    tn = idx_ref.shape[1]
    # One-hot selector built with a 2-D iota (TPU requires >= 2-D iota).
    row = jax.lax.broadcasted_iota(jnp.int32, (v, tn), 0)     # (V, TN)
    onehot = (row == idx).astype(emb_t_ref.dtype)             # (V, TN)
    out_t_ref[...] = jnp.dot(
        emb_t_ref[...], onehot, preferred_element_type=jnp.float32
    ).astype(out_t_ref.dtype)


def _round_up(x, m):
    return ((x + m - 1) // m) * m


def prepare_input_pallas(batch_ids, embedding, *, tn=None):
    """vec[B, S, D] = embedding[batch_ids]  (embedding lookup via Pallas)."""
    B, S = batch_ids.shape
    V, D = embedding.shape
    N = B * S

    # --- pick the token tile TN: multiple of 128, bound the (V, TN) one-hot
    #     intermediate to ~4 MiB so the kernel fits v7x's smaller VMEM.
    if tn is None:
        max_cols = (4 * 1024 * 1024) // (V * 4)               # f32 one-hot budget
        tn = min(1024, max(128, (max_cols // 128) * 128))
    tn = max(128, (tn // 128) * 128)

    n_pad = _round_up(N, tn)
    ids = batch_ids.reshape(-1).astype(jnp.int32)
    # Pad tokens gather row 0; the padded columns are sliced off below.
    ids = jnp.pad(ids, (0, n_pad - N)).reshape(1, n_pad)

    # Transposed table: (D, V). Lane-dense VMEM layout, dense HBM->VMEM DMA.
    emb_t = embedding.T

    grid = (n_pad // tn,)

    # --- VMEM budget (bytes), with padding to the (8, 128) tile and headroom.
    d_pad = _round_up(D, 8)
    v_lane = _round_up(V, 128)
    v_sub = _round_up(V, 8)
    table_bytes = 2 * d_pad * v_lane * 4          # resident table (x2 safety)
    idx_bytes = 2 * 8 * tn * 4                    # double-buffered ids block
    out_bytes = 2 * d_pad * tn * 4                # double-buffered output block
    onehot_bytes = 2 * v_sub * tn * 4             # in-kernel one-hot temp
    needed = table_bytes + idx_bytes + out_bytes + onehot_bytes
    vmem_limit = int(min(max(2 * needed, 8 << 20), 48 << 20))

    out_t = pl.pallas_call(
        _gather_kernel,
        out_shape=jax.ShapeDtypeStruct((D, n_pad), embedding.dtype),
        grid=grid,
        in_specs=[
            pl.BlockSpec((1, tn), lambda i: (0, i)),   # ids: blocked over tokens
            pl.BlockSpec((D, V), lambda i: (0, 0)),    # table: resident every step
        ],
        out_specs=pl.BlockSpec((D, tn), lambda i: (0, i)),  # lane-dense output
        compiler_params=pltpu.CompilerParams(
            dimension_semantics=("parallel",),          # shard token blocks (v7x: 2 TCs)
            vmem_limit_bytes=vmem_limit,
        ),
    )(ids, emb_t)

    # Drop padding, restore (N, D) then (B, S, D). Transpose/reshape here is
    # layout plumbing done once in XLA, outside the hot loop.
    vec = out_t[:, :N].T.reshape(B, S, D)
    return vec


def direct_forward(batch_ids, embedding):
    """Mirror of direct.forward(batch, embedding, ...): returns (vec, None)."""
    vec = prepare_input_pallas(batch_ids, embedding)
    return vec, None


if __name__ == "__main__":
    key = jax.random.PRNGKey(0)
    k_ids, k_emb, k_w, k_b = jax.random.split(key, 4)

    # Small shapes consistent with the module: vocab=64, feature dim D=10
    # (matches the nn.Linear(10, 10) declared in __init__), batch=2, seq=8.
    B, S, V, D = 2, 8, 64, 10
    batch_ids = jax.random.randint(k_ids, (B, S), 0, V, dtype=jnp.int32)
    embedding = jax.random.normal(k_emb, (V, D), dtype=jnp.float32)

    # Deterministically-initialized parameters of the (unused-in-forward)
    # nn.Linear(10, 10), kept only for parity with the module's __init__.
    linear_w = jax.random.normal(k_w, (10, 10), dtype=jnp.float32) * 0.1
    linear_b = jax.random.normal(k_b, (10,), dtype=jnp.float32) * 0.1
    del linear_w, linear_b  # forward() never uses self.linear

    vec, none_out = direct_forward(batch_ids, embedding)
    vec = jax.block_until_ready(vec)

    # Correctness check against the plain-JAX gather.
    ref = embedding[batch_ids]
    assert none_out is None
    assert vec.shape == (B, S, D)
    assert jnp.allclose(vec, ref, atol=1e-5, rtol=1e-5)

    print("KERNEL_OK")
</pallas_src>

<mosaic_0001>
module attributes {stable_mosaic.version = 11 : i64} {
  func.func @_gather_kernel(%arg0: i32, %arg1: memref<1x1024xi32, #tpu.memory_space<vmem>>, %arg2: memref<10x64xf32, #tpu.memory_space<vmem>>, %arg3: memref<10x1024xf32, #tpu.memory_space<vmem>>) attributes {dimension_semantics = [#tpu.dimension_semantics<parallel>], iteration_bounds = array<i64: 1>, scalar_prefetch = 0 : i64, scratch_operands = 0 : i64, tpu.core_type = #tpu.core_type<tc>, window_params = [{transform_indices = @transform_0, window_bounds = array<i64: 1, 1024>}, {pipeline_mode = #tpu.pipeline_mode<synchronous>, transform_indices = @transform_1, window_bounds = array<i64: 10, 64>}, {transform_indices = @transform_2, window_bounds = array<i64: 10, 1024>}]} {
    %c0 = arith.constant 0 : index
    %c0_0 = arith.constant 0 : index
    %0 = vector.load %arg1[%c0, %c0_0] : memref<1x1024xi32, #tpu.memory_space<vmem>>, vector<1x1024xi32>
    %1 = tpu.iota {dimensions = array<i32: 0>} : vector<64x1024xi32>
    %2 = vector.broadcast %0 : vector<1x1024xi32> to vector<64x1024xi32>
    %3 = arith.cmpi eq, %1, %2 : vector<64x1024xi32>
    %4 = arith.extui %3 : vector<64x1024xi1> to vector<64x1024xi32>
    %5 = arith.sitofp %4 : vector<64x1024xi32> to vector<64x1024xf32>
    %c0_1 = arith.constant 0 : index
    %c0_2 = arith.constant 0 : index
    %6 = vector.load %arg2[%c0_1, %c0_2] : memref<10x64xf32, #tpu.memory_space<vmem>>, vector<10x64xf32>
    %cst = arith.constant dense<0.000000e+00> : vector<10x1024xf32>
    %7 = tpu.matmul %6, %5, %cst {dimension_numbers = #tpu.dot_dimension_numbers<[1], [0], [0], [1], [0, 0, 1, 1], [], []>} : vector<10x64xf32>, vector<64x1024xf32>, vector<10x1024xf32> -> vector<10x1024xf32>
    %c0_3 = arith.constant 0 : index
    %c0_4 = arith.constant 0 : index
    %8 = vector.load %arg3[%c0_3, %c0_4] : memref<10x1024xf32, #tpu.memory_space<vmem>>, vector<10x1024xf32>
    tpu.vector_store %arg3[%c0_3, %c0_4], %7 {strides = array<i32>} : memref<10x1024xf32, #tpu.memory_space<vmem>>, vector<10x1024xf32>,
    return
  }
  func.func @transform_0(%arg0: i32) -> (i32, i32) {
    %c0_i32 = arith.constant 0 : i32
    %c0_i32_0 = arith.constant 0 : i32
    return %c0_i32, %arg0 : i32, i32
  }
  func.func @transform_1(%arg0: i32) -> (i32, i32) {
    %c0_i32 = arith.constant 0 : i32
    %c0_i32_0 = arith.constant 0 : i32
    %c0_i32_1 = arith.constant 0 : i32
    return %c0_i32, %c0_i32_0 : i32, i32
  }
  func.func @transform_2(%arg0: i32) -> (i32, i32) {
    %c0_i32 = arith.constant 0 : i32
    %c0_i32_0 = arith.constant 0 : i32
    return %c0_i32, %arg0 : i32, i32
  }
}

</mosaic_0001>

<llo_original>
// kernel: tpu_custom_call.1
$region0: #{tpu_custom_call.1}
  #allocation0 [shape = 'u32[]', space=smem, size = 0x4, offset = 0x4, fixed_abs, tag = 'smem constant byte address 0x4 - core index']
  #allocation1 [shape = 'u32[144,128]{1,0:T(1,128)}', space=vmem, size = 0x12000, scoped, tag = 'internal scratch']
  %s0 = inlined_call_operand.hbm [shape: s32[1,1024], index: 0, kind: input, shape index: {}]
  %s1 = inlined_call_operand.hbm [shape: f32[10,64], index: 1, kind: input, shape index: {}]
  %s2 = inlined_call_operand.hbm [shape: f32[10,1024], index: 2, kind: output, shape index: {}]
  %s3 = sld [smem:[#allocation0]]
  $region26: #{tpu_custom_call.1} parent=0
    _
  %s5 = ssub.s32 1, %s3
  %s6 = scalar_select 0, %s5, %s3
  $region1: #{tpu_custom_call.1} parent=0
    #allocation2 [shape = 'u8[4096]{0}', space=vmem, size = 0x1000, scoped, tag = 'input window, operand 0, single buffered']
    #allocation3 [shape = 's32[1]{0}', space=sflag, size = 0x4, scoped, tag = 'scoped memory for tpu_custom_call.1']
    #allocation4 [shape = 's32[1]{0}', space=sflag, size = 0x4, scoped, tag = 'scoped memory for tpu_custom_call.1']
    #allocation5 [shape = 'u8[8192]{0}', space=vmem, size = 0x2000, scoped, tag = 'input window, operand 1, single buffered']
    #allocation6 [shape = 's32[1]{0}', space=sflag, size = 0x4, scoped, tag = 'scoped memory for tpu_custom_call.1']
    #allocation7 [shape = 'u8[65536]{0}', space=vmem, size = 0x10000, scoped, tag = 'output window, operand 0, single buffered']
    %7 = vsyncpa [#allocation3], 0
    %8 = vsyncpa [#allocation6], 0
    %9 = vsyncpa [#allocation4], 0
    // Predicated region
    $region2: #{tpu_custom_call.1} parent=1 // pred_check
      _
    $region3: #{tpu_custom_call.1} parent=1 // pred_check_branch
      %11 = sbr.rel (0) target = $region5
    $region4: #{tpu_custom_call.1} parent=1 // pred_region
      %s13 = ssub.s32 128, 128
      %14 = vsyncadd [#allocation3], %s13
      %s16 = sshll.u32 [#allocation2], 4
      %s17 = int_to_ptr.vmem [resolvable:$true] %s16
      %19 = dma.hbm_to_vmem [thread:$0]  %s0, 128, %s17, [#allocation3]
    $region5: #{tpu_custom_call.1} parent=1 // pred_fallthru
      _
    // Predicated region
    $region6: #{tpu_custom_call.1} parent=1 // pred_check
      _
    $region7: #{tpu_custom_call.1} parent=1 // pred_check_branch
      %21 = sbr.rel (0) target = $region9
    $region8: #{tpu_custom_call.1} parent=1 // pred_region
      %s23 = ssub.s32 256, 256
      %24 = vsyncadd [#allocation6], %s23
      %s25 = sshll.u32 [#allocation5], 4
      %s26 = int_to_ptr.vmem [resolvable:$true] %s25
      %31 = dma.hbm_to_vmem [thread:$0]  %s1, 256, %s26, [#allocation6], 128, 128, 8
    $region9: #{tpu_custom_call.1} parent=1 // pred_fallthru
      _
    // Predicated region
    $region10: #{tpu_custom_call.1} parent=1 // pred_check
      _
    $region11: #{tpu_custom_call.1} parent=1 // pred_check_branch
      %33 = sbr.rel (0) target = $region13
    $region12: #{tpu_custom_call.1} parent=1 // pred_region
      %34 = dma.done [#allocation3], 128
    $region13: #{tpu_custom_call.1} parent=1 // pred_fallthru
      _
    // Predicated region
    $region14: #{tpu_custom_call.1} parent=1 // pred_check
      _
    $region15: #{tpu_custom_call.1} parent=1 // pred_check_branch
      %36 = sbr.rel (0) target = $region17
    $region16: #{tpu_custom_call.1} parent=1 // pred_region
      %37 = dma.done [#allocation6], 256
    $region17: #{tpu_custom_call.1} parent=1 // pred_fallthru
      _
    %v38 = vld [vmem:[#allocation2] sm:$0xff]
    %v39 = vlaneseq
    %v40 = vshrl.u32 %v39, 7
    %v41 = vadd.s32 %v40, 8
    %v42 = vadd.s32 %v40, 16
    %v43 = vadd.s32 %v40, 24
    %v44 = vadd.s32 %v40, 32
    %v45 = vadd.s32 %v40, 40
    %v46 = vadd.s32 %v40, 48
    %v47 = vadd.s32 %v40, 56
    %v48 = vlaneseq
    %v49 = vshrl.u32 %v48, 7
    %v50 = vsub.s32 0, %v49
    %v51 = vrot.slane %v38, %v50
    %v52 = vlaneseq
    %v53 = vshrl.u32 %v52, 7
    %v54 = vsub.s32 1, %v53
    %v55 = vrot.slane %v38, %v54
    %v56 = vlaneseq
    %v57 = vshrl.u32 %v56, 7
    %v58 = vsub.s32 2, %v57
    %v59 = vrot.slane %v38, %v58
    %v60 = vlaneseq
    %v61 = vshrl.u32 %v60, 7
    %v62 = vsub.s32 3, %v61
    %v63 = vrot.slane %v38, %v62
    %v64 = vlaneseq
    %v65 = vshrl.u32 %v64, 7
    %v66 = vsub.s32 4, %v65
    %v67 = vrot.slane %v38, %v66
    %v68 = vlaneseq
    %v69 = vshrl.u32 %v68, 7
    %v70 = vsub.s32 5, %v69
    %v71 = vrot.slane %v38, %v70
    %v72 = vlaneseq
    %v73 = vshrl.u32 %v72, 7
    %v74 = vsub.s32 6, %v73
    %v75 = vrot.slane %v38, %v74
    %v76 = vlaneseq
    %v77 = vshrl.u32 %v76, 7
    %v78 = vsub.s32 7, %v77
    %v79 = vrot.slane %v38, %v78
    %vm80 = vcmp.eq.s32.totalorder %v40, %v51
    %vm81 = vcmp.eq.s32.totalorder %v40, %v55
    %vm82 = vcmp.eq.s32.totalorder %v40, %v59
    %vm83 = vcmp.eq.s32.totalorder %v40, %v63
    %vm84 = vcmp.eq.s32.totalorder %v40, %v67
    %vm85 = vcmp.eq.s32.totalorder %v40, %v71
    %vm86 = vcmp.eq.s32.totalorder %v40, %v75
    %vm87 = vcmp.eq.s32.totalorder %v40, %v79
    %vm88 = vcmp.eq.s32.totalorder %v41, %v51
    %vm89 = vcmp.eq.s32.totalorder %v41, %v55
    %vm90 = vcmp.eq.s32.totalorder %v41, %v59
    %vm91 = vcmp.eq.s32.totalorder %v41, %v63
    %vm92 = vcmp.eq.s32.totalorder %v41, %v67
    %vm93 = vcmp.eq.s32.totalorder %v41, %v71
    %vm94 = vcmp.eq.s32.totalorder %v41, %v75
    %vm95 = vcmp.eq.s32.totalorder %v41, %v79
    %vm96 = vcmp.eq.s32.totalorder %v42, %v51
    %vm97 = vcmp.eq.s32.totalorder %v42, %v55
    %vm98 = vcmp.eq.s32.totalorder %v42, %v59
    %vm99 = vcmp.eq.s32.totalorder %v42, %v63
    %vm100 = vcmp.eq.s32.totalorder %v42, %v67
    %vm101 = vcmp.eq.s32.totalorder %v42, %v71
    %vm102 = vcmp.eq.s32.totalorder %v42, %v75
    %vm103 = vcmp.eq.s32.totalorder %v42, %v79
    %vm104 = vcmp.eq.s32.totalorder %v43, %v51
    %vm105 = vcmp.eq.s32.totalorder %v43, %v55
    %vm106 = vcmp.eq.s32.totalorder %v43, %v59
    %vm107 = vcmp.eq.s32.totalorder %v43, %v63
    %vm108 = vcmp.eq.s32.totalorder %v43, %v67
    %vm109 = vcmp.eq.s32.totalorder %v43, %v71
    %vm110 = vcmp.eq.s32.totalorder %v43, %v75
    %vm111 = vcmp.eq.s32.totalorder %v43, %v79
    %vm112 = vcmp.eq.s32.totalorder %v44, %v51
    %vm113 = vcmp.eq.s32.totalorder %v44, %v55
    %vm114 = vcmp.eq.s32.totalorder %v44, %v59
    %vm115 = vcmp.eq.s32.totalorder %v44, %v63
    %vm116 = vcmp.eq.s32.totalorder %v44, %v67
    %vm117 = vcmp.eq.s32.totalorder %v44, %v71
    %vm118 = vcmp.eq.s32.totalorder %v44, %v75
    %vm119 = vcmp.eq.s32.totalorder %v44, %v79
    %vm120 = vcmp.eq.s32.totalorder %v45, %v51
    %vm121 = vcmp.eq.s32.totalorder %v45, %v55
    %vm122 = vcmp.eq.s32.totalorder %v45, %v59
    %vm123 = vcmp.eq.s32.totalorder %v45, %v63
    %vm124 = vcmp.eq.s32.totalorder %v45, %v67
    %vm125 = vcmp.eq.s32.totalorder %v45, %v71
    %vm126 = vcmp.eq.s32.totalorder %v45, %v75
    %vm127 = vcmp.eq.s32.totalorder %v45, %v79
    %vm128 = vcmp.eq.s32.totalorder %v46, %v51
    %vm129 = vcmp.eq.s32.totalorder %v46, %v55
    %vm130 = vcmp.eq.s32.totalorder %v46, %v59
    %vm131 = vcmp.eq.s32.totalorder %v46, %v63
    %vm132 = vcmp.eq.s32.totalorder %v46, %v67
    %vm133 = vcmp.eq.s32.totalorder %v46, %v71
    %vm134 = vcmp.eq.s32.totalorder %v46, %v75
    %vm135 = vcmp.eq.s32.totalorder %v46, %v79
    %vm136 = vcmp.eq.s32.totalorder %v47, %v51
    %vm137 = vcmp.eq.s32.totalorder %v47, %v55
    %vm138 = vcmp.eq.s32.totalorder %v47, %v59
    %vm139 = vcmp.eq.s32.totalorder %v47, %v63
    %vm140 = vcmp.eq.s32.totalorder %v47, %v67
    %vm141 = vcmp.eq.s32.totalorder %v47, %v71
    %vm142 = vcmp.eq.s32.totalorder %v47, %v75
    %vm143 = vcmp.eq.s32.totalorder %v47, %v79
    %v144 = vsel %vm80, 1, 0
    %v145 = vsel %vm81, 1, 0
    %v146 = vsel %vm82, 1, 0
    %v147 = vsel %vm83, 1, 0
    %v148 = vsel %vm84, 1, 0
    %v149 = vsel %vm85, 1, 0
    %v150 = vsel %vm86, 1, 0
    %v151 = vsel %vm87, 1, 0
    %v152 = vsel %vm88, 1, 0
    %v153 = vsel %vm89, 1, 0
    %v154 = vsel %vm90, 1, 0
    %v155 = vsel %vm91, 1, 0
    %v156 = vsel %vm92, 1, 0
    %v157 = vsel %vm93, 1, 0
    %v158 = vsel %vm94, 1, 0
    %v159 = vsel %vm95, 1, 0
    %v160 = vsel %vm96, 1, 0
    %v161 = vsel %vm97, 1, 0
    %v162 = vsel %vm98, 1, 0
    %v163 = vsel %vm99, 1, 0
    %v164 = vsel %vm100, 1, 0
    %v165 = vsel %vm101, 1, 0
    %v166 = vsel %vm102, 1, 0
    %v167 = vsel %vm103, 1, 0
    %v168 = vsel %vm104, 1, 0
    %v169 = vsel %vm105, 1, 0
    %v170 = vsel %vm106, 1, 0
    %v171 = vsel %vm107, 1, 0
    %v172 = vsel %vm108, 1, 0
    %v173 = vsel %vm109, 1, 0
    %v174 = vsel %vm110, 1, 0
    %v175 = vsel %vm111, 1, 0
    %v176 = vsel %vm112, 1, 0
    %v177 = vsel %vm113, 1, 0
    %v178 = vsel %vm114, 1, 0
    %v179 = vsel %vm115, 1, 0
    %v180 = vsel %vm116, 1, 0
    %v181 = vsel %vm117, 1, 0
    %v182 = vsel %vm118, 1, 0
    %v183 = vsel %vm119, 1, 0
    %v184 = vsel %vm120, 1, 0
    %v185 = vsel %vm121, 1, 0
    %v186 = vsel %vm122, 1, 0
    %v187 = vsel %vm123, 1, 0
    %v188 = vsel %vm124, 1, 0
    %v189 = vsel %vm125, 1, 0
    %v190 = vsel %vm126, 1, 0
    %v191 = vsel %vm127, 1, 0
    %v192 = vsel %vm128, 1, 0
    %v193 = vsel %vm129, 1, 0
    %v194 = vsel %vm130, 1, 0
    %v195 = vsel %vm131, 1, 0
    %v196 = vsel %vm132, 1, 0
    %v197 = vsel %vm133, 1, 0
    %v198 = vsel %vm134, 1, 0
    %v199 = vsel %vm135, 1, 0
    %v200 = vsel %vm136, 1, 0
    %v201 = vsel %vm137, 1, 0
    %v202 = vsel %vm138, 1, 0
    %v203 = vsel %vm139, 1, 0
    %v204 = vsel %vm140, 1, 0
    %v205 = vsel %vm141, 1, 0
    %v206 = vsel %vm142, 1, 0
    %v207 = vsel %vm143, 1, 0
    %v208 = vcvt.s32.f32 %v144
    %v209 = vcvt.s32.f32 %v145
    %v210 = vcvt.s32.f32 %v146
    %v211 = vcvt.s32.f32 %v147
    %v212 = vcvt.s32.f32 %v148
    %v213 = vcvt.s32.f32 %v149
    %v214 = vcvt.s32.f32 %v150
    %v215 = vcvt.s32.f32 %v151
    %v216 = vcvt.s32.f32 %v152
    %v217 = vcvt.s32.f32 %v153
    %v218 = vcvt.s32.f32 %v154
    %v219 = vcvt.s32.f32 %v155
    %v220 = vcvt.s32.f32 %v156
    %v221 = vcvt.s32.f32 %v157
    %v222 = vcvt.s32.f32 %v158
    %v223 = vcvt.s32.f32 %v159
    %v224 = vcvt.s32.f32 %v160
    %v225 = vcvt.s32.f32 %v161
    %v226 = vcvt.s32.f32 %v162
    %v227 = vcvt.s32.f32 %v163
    %v228 = vcvt.s32.f32 %v164
    %v229 = vcvt.s32.f32 %v165
    %v230 = vcvt.s32.f32 %v166
    %v231 = vcvt.s32.f32 %v167
    %v232 = vcvt.s32.f32 %v168
    %v233 = vcvt.s32.f32 %v169
    %v234 = vcvt.s32.f32 %v170
    %v235 = vcvt.s32.f32 %v171
    %v236 = vcvt.s32.f32 %v172
    %v237 = vcvt.s32.f32 %v173
    %v238 = vcvt.s32.f32 %v174
    %v239 = vcvt.s32.f32 %v175
    %v240 = vcvt.s32.f32 %v176
    %v241 = vcvt.s32.f32 %v177
    %v242 = vcvt.s32.f32 %v178
    %v243 = vcvt.s32.f32 %v179
    %v244 = vcvt.s32.f32 %v180
    %v245 = vcvt.s32.f32 %v181
    %v246 = vcvt.s32.f32 %v182
    %v247 = vcvt.s32.f32 %v183
    %v248 = vcvt.s32.f32 %v184
    %v249 = vcvt.s32.f32 %v185
    %v250 = vcvt.s32.f32 %v186
    %v251 = vcvt.s32.f32 %v187
    %v252 = vcvt.s32.f32 %v188
    %v253 = vcvt.s32.f32 %v189
    %v254 = vcvt.s32.f32 %v190
    %v255 = vcvt.s32.f32 %v191
    %v256 = vcvt.s32.f32 %v192
    %v257 = vcvt.s32.f32 %v193
    %v258 = vcvt.s32.f32 %v194
    %v259 = vcvt.s32.f32 %v195
    %v260 = vcvt.s32.f32 %v196
    %v261 = vcvt.s32.f32 %v197
    %v262 = vcvt.s32.f32 %v198
    %v263 = vcvt.s32.f32 %v199
    %v264 = vcvt.s32.f32 %v200
    %v265 = vcvt.s32.f32 %v201
    %v266 = vcvt.s32.f32 %v202
    %v267 = vcvt.s32.f32 %v203
    %v268 = vcvt.s32.f32 %v204
    %v269 = vcvt.s32.f32 %v205
    %v270 = vcvt.s32.f32 %v206
    %v271 = vcvt.s32.f32 %v207
    %v272 = vld [vmem:[#allocation5] sm:$0xff]
    %v273 = vld [vmem:[#allocation5 + $0x8] sm:$0x3]
    %vm274 = vcmask 523264
    %v276 = vsel %vm274, %v272, 0
    %v279 = vsel %vm274, %v273, 0
    %281 = vmatprep.subr.mxu0 0.0
    %282 = vmatpush1.msra.mxu0 0.0
    %283 = vmatprep.subr.mxu0 0.0
    %284 = vmatpush1.msra.mxu0 0.0
    %285 = vmatprep.subr.mxu0 0.0
    %286 = vmatpush1.msra.mxu0 0.0
    %287 = vmatprep.subr.mxu0 0.0
    %288 = vmatpush1.msra.mxu0 0.0
    %289 = vmatprep.subr.mxu0 0.0
    %290 = vmatpush1.msra.mxu0 0.0
    %291 = vmatprep.subr.mxu0 0.0
    %292 = vmatpush1.msra.mxu0 0.0
    %293 = vmatprep.subr.mxu0 0.0
    %294 = vmatpush1.msra.mxu0 0.0
    %295 = vmatprep.subr.mxu0 0.0
    %296 = vmatpush1.msra.mxu0 0.0
    %297 = vmatprep.subr.mxu0 %v265
    %298 = vmatpush1.msra.mxu0 %v264
    %299 = vmatprep.subr.mxu0 %v257
    %300 = vmatpush1.msra.mxu0 %v256
    %301 = vmatprep.subr.mxu0 %v249
    %302 = vmatpush1.msra.mxu0 %v248
    %303 = vmatprep.subr.mxu0 %v241
    %304 = vmatpush1.msra.mxu0 %v240
    %305 = vmatprep.subr.mxu0 %v233
    %306 = vmatpush1.msra.mxu0 %v232
    %307 = vmatprep.subr.mxu0 %v225
    %308 = vmatpush1.msra.mxu0 %v224
    %309 = vmatprep.subr.mxu0 %v217
    %310 = vmatpush1.msra.mxu0 %v216
    %311 = vmatprep.subr.mxu0 %v209
    %312 = vmatpush1.msra.mxu0 %v208
    %313 = vmatprep.subr.mxu0 0.0
    %314 = vmatpush2.msra.mxu0 0.0
    %315 = vmatprep.subr.mxu0 0.0
    %316 = vmatpush2.msra.mxu0 0.0
    %317 = vmatprep.subr.mxu0 0.0
    %318 = vmatpush2.msra.mxu0 0.0
    %319 = vmatprep.subr.mxu0 0.0
    %320 = vmatpush2.msra.mxu0 0.0
    %321 = vmatprep.subr.mxu0 0.0
    %322 = vmatpush2.msra.mxu0 0.0
    %323 = vmatprep.subr.mxu0 0.0
    %324 = vmatpush2.msra.mxu0 0.0
    %325 = vmatprep.subr.mxu0 0.0
    %326 = vmatpush2.msra.mxu0 0.0
    %327 = vmatprep.subr.mxu0 0.0
    %328 = vmatpush2.msra.mxu0 0.0
    %329 = vmatprep.subr.mxu0 0.0
    %330 = vmatpush2.msra.mxu0 0.0
    %331 = vmatprep.subr.mxu0 0.0
    %332 = vmatpush2.msra.mxu0 0.0
    %333 = vmatprep.subr.mxu0 0.0
    %334 = vmatpush2.msra.mxu0 0.0
    %335 = vmatprep.subr.mxu0 0.0
    %336 = vmatpush2.msra.mxu0 0.0
    %337 = vmatprep.subr.mxu0 0.0
    %338 = vmatpush2.msra.mxu0 0.0
    %339 = vmatprep.subr.mxu0 0.0
    %340 = vmatpush2.msra.mxu0 0.0
    %341 = vmatprep.subr.mxu0 0.0
    %342 = vmatpush2.msra.mxu0 0.0
    %343 = vmatprep.subr.mxu0 0.0
    %344 = vmatpush2.msra.mxu0 0.0
    %345 = vmatprep.mubr.f32.mxu0 0.0
    %346 = vmatmul.mubr.f32.gmra.mxu0 %v276
    %v347 = vpop.f32.mrf.mxu0
    %v348 = vadd.f32 0.0, %v347
    %v349 = vpop.f32.mrf.mxu0
    %v350 = vadd.f32 0.0, %v349
    %351 = vmatprep.mubr.f32.mxu0 0.0
    %352 = vmatmul.mubr.f32.gmra.mxu0 %v279
    %v353 = vpop.f32.mrf.mxu0
    %v354 = vadd.f32 0.0, %v353
    %v355 = vpop.f32.mrf.mxu0
    %v356 = vadd.f32 0.0, %v355
    %357 = vdwg.mxu0
    %358 = vmatprep.subr.mxu0 0.0
    %359 = vmatpush1.msra.mxu0 0.0
    %360 = vmatprep.subr.mxu0 0.0
    %361 = vmatpush1.msra.mxu0 0.0
    %362 = vmatprep.subr.mxu0 0.0
    %363 = vmatpush1.msra.mxu0 0.0
    %364 = vmatprep.subr.mxu0 0.0
    %365 = vmatpush1.msra.mxu0 0.0
    %366 = vmatprep.subr.mxu0 0.0
    %367 = vmatpush1.msra.mxu0 0.0
    %368 = vmatprep.subr.mxu0 0.0
    %369 = vmatpush1.msra.mxu0 0.0
    %370 = vmatprep.subr.mxu0 0.0
    %371 = vmatpush1.msra.mxu0 0.0
    %372 = vmatprep.subr.mxu0 0.0
    %373 = vmatpush1.msra.mxu0 0.0
    %374 = vmatprep.subr.mxu0 %v267
    %375 = vmatpush1.msra.mxu0 %v266
    %376 = vmatprep.subr.mxu0 %v259
    %377 = vmatpush1.msra.mxu0 %v258
    %378 = vmatprep.subr.mxu0 %v251
    %379 = vmatpush1.msra.mxu0 %v250
    %380 = vmatprep.subr.mxu0 %v243
    %381 = vmatpush1.msra.mxu0 %v242
    %382 = vmatprep.subr.mxu0 %v235
    %383 = vmatpush1.msra.mxu0 %v234
    %384 = vmatprep.subr.mxu0 %v227
    %385 = vmatpush1.msra.mxu0 %v226
    %386 = vmatprep.subr.mxu0 %v219
    %387 = vmatpush1.msra.mxu0 %v218
    %388 = vmatprep.subr.mxu0 %v211
    %389 = vmatpush1.msra.mxu0 %v210
    %390 = vmatprep.subr.mxu0 0.0
    %391 = vmatpush2.msra.mxu0 0.0
    %392 = vmatprep.subr.mxu0 0.0
    %393 = vmatpush2.msra.mxu0 0.0
    %394 = vmatprep.subr.mxu0 0.0
    %395 = vmatpush2.msra.mxu0 0.0
    %396 = vmatprep.subr.mxu0 0.0
    %397 = vmatpush2.msra.mxu0 0.0
    %398 = vmatprep.subr.mxu0 0.0
    %399 = vmatpush2.msra.mxu0 0.0
    %400 = vmatprep.subr.mxu0 0.0
    %401 = vmatpush2.msra.mxu0 0.0
    %402 = vmatprep.subr.mxu0 0.0
    %403 = vmatpush2.msra.mxu0 0.0
    %404 = vmatprep.subr.mxu0 0.0
    %405 = vmatpush2.msra.mxu0 0.0
    %406 = vmatprep.subr.mxu0 0.0
    %407 = vmatpush2.msra.mxu0 0.0
    %408 = vmatprep.subr.mxu0 0.0
    %409 = vmatpush2.msra.mxu0 0.0
    %410 = vmatprep.subr.mxu0 0.0
    %411 = vmatpush2.msra.mxu0 0.0
    %412 = vmatprep.subr.mxu0 0.0
    %413 = vmatpush2.msra.mxu0 0.0
    %414 = vmatprep.subr.mxu0 0.0
    %415 = vmatpush2.msra.mxu0 0.0
    %416 = vmatprep.subr.mxu0 0.0
    %417 = vmatpush2.msra.mxu0 0.0
    %418 = vmatprep.subr.mxu0 0.0
    %419 = vmatpush2.msra.mxu0 0.0
    %420 = vmatprep.subr.mxu0 0.0
    %421 = vmatpush2.msra.mxu0 0.0
    %422 = vmatprep.mubr.f32.mxu0 0.0
    %423 = vmatmul.mubr.f32.gmra.mxu0 %v276
    %v424 = vpop.f32.mrf.mxu0
    %v425 = vadd.f32 0.0, %v424
    %v426 = vpop.f32.mrf.mxu0
    %v427 = vadd.f32 0.0, %v426
    %428 = vmatprep.mubr.f32.mxu0 0.0
    %429 = vmatmul.mubr.f32.gmra.mxu0 %v279
    %v430 = vpop.f32.mrf.mxu0
    %v431 = vadd.f32 0.0, %v430
    %v432 = vpop.f32.mrf.mxu0
    %v433 = vadd.f32 0.0, %v432
    %434 = vdwg.mxu0
    %435 = vmatprep.subr.mxu0 0.0
    %436 = vmatpush1.msra.mxu0 0.0
    %437 = vmatprep.subr.mxu0 0.0
    %438 = vmatpush1.msra.mxu0 0.0
    %439 = vmatprep.subr.mxu0 0.0
    %440 = vmatpush1.msra.mxu0 0.0
    %441 = vmatprep.subr.mxu0 0.0
    %442 = vmatpush1.msra.mxu0 0.0
    %443 = vmatprep.subr.mxu0 0.0
    %444 = vmatpush1.msra.mxu0 0.0
    %445 = vmatprep.subr.mxu0 0.0
    %446 = vmatpush1.msra.mxu0 0.0
    %447 = vmatprep.subr.mxu0 0.0
    %448 = vmatpush1.msra.mxu0 0.0
    %449 = vmatprep.subr.mxu0 0.0
    %450 = vmatpush1.msra.mxu0 0.0
    %451 = vmatprep.subr.mxu0 %v269
    %452 = vmatpush1.msra.mxu0 %v268
    %453 = vmatprep.subr.mxu0 %v261
    %454 = vmatpush1.msra.mxu0 %v260
    %455 = vmatprep.subr.mxu0 %v253
    %456 = vmatpush1.msra.mxu0 %v252
    %457 = vmatprep.subr.mxu0 %v245
    %458 = vmatpush1.msra.mxu0 %v244
    %459 = vmatprep.subr.mxu0 %v237
    %460 = vmatpush1.msra.mxu0 %v236
    %461 = vmatprep.subr.mxu0 %v229
    %462 = vmatpush1.msra.mxu0 %v228
    %463 = vmatprep.subr.mxu0 %v221
    %464 = vmatpush1.msra.mxu0 %v220
    %465 = vmatprep.subr.mxu0 %v213
    %466 = vmatpush1.msra.mxu0 %v212
    %467 = vmatprep.subr.mxu0 0.0
    %468 = vmatpush2.msra.mxu0 0.0
    %469 = vmatprep.subr.mxu0 0.0
    %470 = vmatpush2.msra.mxu0 0.0
    %471 = vmatprep.subr.mxu0 0.0
    %472 = vmatpush2.msra.mxu0 0.0
    %473 = vmatprep.subr.mxu0 0.0
    %474 = vmatpush2.msra.mxu0 0.0
    %475 = vmatprep.subr.mxu0 0.0
    %476 = vmatpush2.msra.mxu0 0.0
    %477 = vmatprep.subr.mxu0 0.0
    %478 = vmatpush2.msra.mxu0 0.0
    %479 = vmatprep.subr.mxu0 0.0
    %480 = vmatpush2.msra.mxu0 0.0
    %481 = vmatprep.subr.mxu0 0.0
    %482 = vmatpush2.msra.mxu0 0.0
    %483 = vmatprep.subr.mxu0 0.0
    %484 = vmatpush2.msra.mxu0 0.0
    %485 = vmatprep.subr.mxu0 0.0
    %486 = vmatpush2.msra.mxu0 0.0
    %487 = vmatprep.subr.mxu0 0.0
    %488 = vmatpush2.msra.mxu0 0.0
    %489 = vmatprep.subr.mxu0 0.0
    %490 = vmatpush2.msra.mxu0 0.0
    %491 = vmatprep.subr.mxu0 0.0
    %492 = vmatpush2.msra.mxu0 0.0
    %493 = vmatprep.subr.mxu0 0.0
    %494 = vmatpush2.msra.mxu0 0.0
    %495 = vmatprep.subr.mxu0 0.0
    %496 = vmatpush2.msra.mxu0 0.0
    %497 = vmatprep.subr.mxu0 0.0
    %498 = vmatpush2.msra.mxu0 0.0
    %499 = vmatprep.mubr.f32.mxu0 0.0
    %500 = vmatmul.mubr.f32.gmra.mxu0 %v276
    %v501 = vpop.f32.mrf.mxu0
    %v502 = vadd.f32 0.0, %v501
    %v503 = vpop.f32.mrf.mxu0
    %v504 = vadd.f32 0.0, %v503
    %505 = vmatprep.mubr.f32.mxu0 0.0
    %506 = vmatmul.mubr.f32.gmra.mxu0 %v279
    %v507 = vpop.f32.mrf.mxu0
    %v508 = vadd.f32 0.0, %v507
    %v509 = vpop.f32.mrf.mxu0
    %v510 = vadd.f32 0.0, %v509
    %511 = vdwg.mxu0
    %512 = vmatprep.subr.mxu0 0.0
    %513 = vmatpush1.msra.mxu0 0.0
    %514 = vmatprep.subr.mxu0 0.0
    %515 = vmatpush1.msra.mxu0 0.0
    %516 = vmatprep.subr.mxu0 0.0
    %517 = vmatpush1.msra.mxu0 0.0
    %518 = vmatprep.subr.mxu0 0.0
    %519 = vmatpush1.msra.mxu0 0.0
    %520 = vmatprep.subr.mxu0 0.0
    %521 = vmatpush1.msra.mxu0 0.0
    %522 = vmatprep.subr.mxu0 0.0
    %523 = vmatpush1.msra.mxu0 0.0
    %524 = vmatprep.subr.mxu0 0.0
    %525 = vmatpush1.msra.mxu0 0.0
    %526 = vmatprep.subr.mxu0 0.0
    %527 = vmatpush1.msra.mxu0 0.0
    %528 = vmatprep.subr.mxu0 %v271
    %529 = vmatpush1.msra.mxu0 %v270
    %530 = vmatprep.subr.mxu0 %v263
    %531 = vmatpush1.msra.mxu0 %v262
    %532 = vmatprep.subr.mxu0 %v255
    %533 = vmatpush1.msra.mxu0 %v254
    %534 = vmatprep.subr.mxu0 %v247
    %535 = vmatpush1.msra.mxu0 %v246
    %536 = vmatprep.subr.mxu0 %v239
    %537 = vmatpush1.msra.mxu0 %v238
    %538 = vmatprep.subr.mxu0 %v231
    %539 = vmatpush1.msra.mxu0 %v230
    %540 = vmatprep.subr.mxu0 %v223
    %541 = vmatpush1.msra.mxu0 %v222
    %542 = vmatprep.subr.mxu0 %v215
    %543 = vmatpush1.msra.mxu0 %v214
    %544 = vmatprep.subr.mxu0 0.0
    %545 = vmatpush2.msra.mxu0 0.0
    %546 = vmatprep.subr.mxu0 0.0
    %547 = vmatpush2.msra.mxu0 0.0
    %548 = vmatprep.subr.mxu0 0.0
    %549 = vmatpush2.msra.mxu0 0.0
    %550 = vmatprep.subr.mxu0 0.0
    %551 = vmatpush2.msra.mxu0 0.0
    %552 = vmatprep.subr.mxu0 0.0
    %553 = vmatpush2.msra.mxu0 0.0
    %554 = vmatprep.subr.mxu0 0.0
    %555 = vmatpush2.msra.mxu0 0.0
    %556 = vmatprep.subr.mxu0 0.0
    %557 = vmatpush2.msra.mxu0 0.0
    %558 = vmatprep.subr.mxu0 0.0
    %559 = vmatpush2.msra.mxu0 0.0
    %560 = vmatprep.subr.mxu0 0.0
    %561 = vmatpush2.msra.mxu0 0.0
    %562 = vmatprep.subr.mxu0 0.0
    %563 = vmatpush2.msra.mxu0 0.0
    %564 = vmatprep.subr.mxu0 0.0
    %565 = vmatpush2.msra.mxu0 0.0
    %566 = vmatprep.subr.mxu0 0.0
    %567 = vmatpush2.msra.mxu0 0.0
    %568 = vmatprep.subr.mxu0 0.0
    %569 = vmatpush2.msra.mxu0 0.0
    %570 = vmatprep.subr.mxu0 0.0
    %571 = vmatpush2.msra.mxu0 0.0
    %572 = vmatprep.subr.mxu0 0.0
    %573 = vmatpush2.msra.mxu0 0.0
    %574 = vmatprep.subr.mxu0 0.0
    %575 = vmatpush2.msra.mxu0 0.0
    %576 = vmatprep.mubr.f32.mxu0 0.0
    %577 = vmatmul.mubr.f32.gmra.mxu0 %v276
    %v578 = vpop.f32.mrf.mxu0
    %v579 = vadd.f32 0.0, %v578
    %v580 = vpop.f32.mrf.mxu0
    %v581 = vadd.f32 0.0, %v580
    %582 = vmatprep.mubr.f32.mxu0 0.0
    %583 = vmatmul.mubr.f32.gmra.mxu0 %v279
    %v584 = vpop.f32.mrf.mxu0
    %v585 = vadd.f32 0.0, %v584
    %v586 = vpop.f32.mrf.mxu0
    %v587 = vadd.f32 0.0, %v586
    %588 = vdwg.mxu0
    %589 = vst [vmem:[#allocation7] sm:$0xff] %v348
    %590 = vst [vmem:[#allocation7 + $0x8] sm:$0xff] %v350
    %591 = vst [vmem:[#allocation7 + $0x10] sm:$0xff] %v425
    %592 = vst [vmem:[#allocation7 + $0x18] sm:$0xff] %v427
    %593 = vst [vmem:[#allocation7 + $0x20] sm:$0xff] %v502
    %594 = vst [vmem:[#allocation7 + $0x28] sm:$0xff] %v504
    %595 = vst [vmem:[#allocation7 + $0x30] sm:$0xff] %v579
    %596 = vst [vmem:[#allocation7 + $0x38] sm:$0xff] %v581
    %597 = vst [vmem:[#allocation7 + $0x40] sm:$0x3] %v354
    %598 = vst [vmem:[#allocation7 + $0x48] sm:$0x3] %v356
    %599 = vst [vmem:[#allocation7 + $0x50] sm:$0x3] %v431
    %600 = vst [vmem:[#allocation7 + $0x58] sm:$0x3] %v433
    %601 = vst [vmem:[#allocation7 + $0x60] sm:$0x3] %v508
    %602 = vst [vmem:[#allocation7 + $0x68] sm:$0x3] %v510
    %603 = vst [vmem:[#allocation7 + $0x70] sm:$0x3] %v585
    %604 = vst [vmem:[#allocation7 + $0x78] sm:$0x3] %v587
    // Predicated region
    $region18: #{tpu_custom_call.1} parent=1 // pred_check
      _
    $region19: #{tpu_custom_call.1} parent=1 // pred_check_branch
      %606 = sbr.rel (0) target = $region21
    $region20: #{tpu_custom_call.1} parent=1 // pred_region
      %s608 = ssub.s32 2048, 2048
      %609 = vsyncadd [#allocation4], %s608
      %s610 = sshll.u32 [#allocation7], 4
      %s611 = int_to_ptr.vmem [resolvable:$true] %s610
      %616 = dma.vmem_to_hbm [thread:$0]  %s611, 2048, %s2, [#allocation4], 1024, 1024, 64
    $region21: #{tpu_custom_call.1} parent=1 // pred_fallthru
      _
    // Predicated region
    $region22: #{tpu_custom_call.1} parent=1 // pred_check
      _
    $region23: #{tpu_custom_call.1} parent=1 // pred_check_branch
      %618 = sbr.rel (0) target = $region25
    $region24: #{tpu_custom_call.1} parent=1 // pred_region
      %619 = dma.done [#allocation4], 2048
    $region25: #{tpu_custom_call.1} parent=1 // pred_fallthru
      _
    %620 = vsyncpa [#allocation3], 1
    %621 = vsyncpa [#allocation6], 1
    %622 = vsyncpa [#allocation4], 1

</llo_original>
